<compile_context>
chip_gen: v6e
topology: v6e:2x2x1
jax: 0.10.0
libtpu: 0.0.40
codegen_flags: <defaults>
</compile_context>

<pallas_src>
import jax
import jax.numpy as jnp
from jax.experimental import pallas as pl
from jax.experimental.pallas import tpu as pltpu


# ----------------------------------------------------------------------------
# Fused path: conv1x1 + PReLU + PixelShuffle(2) in a single kernel
# ----------------------------------------------------------------------------

def _pixel_shuffle_scatter(W):
    """0/1 scatter matrices S (4, W, 4W):  sum_k y_k @ S[k]  gives the
    PixelShuffle(2) output rows flattened as (H, 4W).

    Output column j = r1*2W + 2*w + r2 is sourced from sub-channel
    k = 2*r1 + r2 at input column w.
    """
    j = jnp.arange(4 * W)
    r1 = j // (2 * W)
    rem = j % (2 * W)
    wcol = rem // 2
    r2 = rem % 2
    src_chan = 2 * r1 + r2                            # (4W,)
    k = jnp.arange(4)[:, None, None]                  # (4,1,1)
    w_in = jnp.arange(W)[None, :, None]               # (1,W,1)
    hit = (src_chan[None, None, :] == k) & (wcol[None, None, :] == w_in)
    return hit.astype(jnp.float32)                    # (4, W, 4W)


def _pick_row_block(H, W, C, cap_bytes=2 << 20):
    """Rows per grid step: full H if it fits the VMEM budget, otherwise the
    largest multiple-of-8 divisor of H that fits; fall back to full H."""
    per_row = 4 * (C * W + 4 * W)                     # f32 bytes: in + out rows
    if H * per_row <= cap_bytes or H <= 8:
        return H
    r = min(H, max(8, (cap_bytes // per_row) // 8 * 8))
    r -= r % 8
    while r >= 8:
        if H % r == 0:
            return r
        r -= 8
    return H


def _up_fused_kernel(w_ref, b_ref, a_ref, s_ref, x_ref, o_ref):
    """One (n, row-block, co) grid step.

    w_ref : (C, C)       f32 SMEM   conv weight (Cout, Cin)
    b_ref : (C,)         f32 SMEM   conv bias
    a_ref : (1,)         f32 SMEM   shared PReLU slope
    s_ref : (4, W, 4W)   f32 VMEM   PixelShuffle scatter matrices (0/1)
    x_ref : (C, RH, W)   f32 VMEM   input rows, all input channels
    o_ref : (RH, 4W)     f32 VMEM   output rows, shuffle already applied
    """
    alpha = a_ref[0]
    co = pl.program_id(2)                 # which group of 4 output channels
    x = x_ref[...]                        # (C, RH, W)
    cin = x.shape[0]

    acc_out = None
    for k in range(4):                    # 4 sub-channels of this output group
        oc = 4 * co + k
        # 1x1 conv as broadcast FMAs on the VPU (fully unrolled, tiny C).
        y = x[0] * w_ref[oc, 0]
        for ci in range(1, cin):
            y = y + x[ci] * w_ref[oc, ci]
        y = y + b_ref[oc]
        # PReLU (single shared slope, PyTorch nn.PReLU() default).
        y = jnp.where(y > 0, y, alpha * y)                       # (RH, W)
        # Scatter this sub-channel into its interleaved output columns on the
        # (otherwise idle) MXU; 0/1 coefficients -> exact.
        d = jnp.dot(y, s_ref[k], preferred_element_type=jnp.float32)
        acc_out = d if acc_out is None else acc_out + d
    o_ref[...] = acc_out                                          # (RH, 4W)


def up_forward_fused(x_nchw, w_conv, b_conv, prelu_alpha):
    N, C, H, W = x_nchw.shape
    assert C % 4 == 0, "PixelShuffle(2) requires channels divisible by 4"
    Co = C // 4
    RH = _pick_row_block(H, W, C)
    scat = _pixel_shuffle_scatter(W)                  # (4, W, 4W)

    out4 = pl.pallas_call(
        _up_fused_kernel,
        out_shape=jax.ShapeDtypeStruct((N, Co, H, 4 * W), jnp.float32),
        grid=(N, H // RH, Co),
        in_specs=[
            pl.BlockSpec(memory_space=pltpu.MemorySpace.SMEM),            # w
            pl.BlockSpec(memory_space=pltpu.MemorySpace.SMEM),            # b
            pl.BlockSpec(memory_space=pltpu.MemorySpace.SMEM),            # alpha
            pl.BlockSpec((4, W, 4 * W), lambda n, r, co: (0, 0, 0)),      # scat
            pl.BlockSpec((None, C, RH, W), lambda n, r, co: (n, 0, r, 0)),  # x
        ],
        out_specs=pl.BlockSpec((None, None, RH, 4 * W),
                               lambda n, r, co: (n, co, r, 0)),
        compiler_params=pltpu.CompilerParams(
            dimension_semantics=("parallel", "parallel", "parallel")),
    )(
        w_conv.reshape(C, C).astype(jnp.float32),
        b_conv.astype(jnp.float32),
        jnp.asarray(prelu_alpha, jnp.float32).reshape(1),
        scat,
        x_nchw.astype(jnp.float32),
    )
    # (N, Co, H, 4W) is bit-for-bit the contiguous layout of (N, Co, 2H, 2W).
    return out4.reshape(N, Co, 2 * H, 2 * W)


# ----------------------------------------------------------------------------
# Fallback path for wide feature maps: conv1x1+PReLU kernel, shuffle in XLA
# ----------------------------------------------------------------------------

def _conv1x1_prelu_kernel(w_ref, b_ref, a_ref, x_ref, o_ref):
    """w:(Cout,Cin) SMEM, b:(Cout,) SMEM, a:(1,) SMEM, x:(Cin,TS), o:(Cout,TS)."""
    alpha = a_ref[0]
    x = x_ref[...]
    cin = x.shape[0]
    cout = o_ref.shape[0]
    for co in range(cout):
        acc = x[0:1, :] * w_ref[co, 0]
        for ci in range(1, cin):
            acc = acc + x[ci:ci + 1, :] * w_ref[co, ci]
        acc = acc + b_ref[co]
        o_ref[co:co + 1, :] = jnp.where(acc > 0, acc, alpha * acc)


def _pick_spatial_tile(hw, cap=2048):
    if hw % 128 != 0:
        return hw
    t = min(hw, cap)
    t -= t % 128
    while hw % t != 0:
        t -= 128
    return t


def conv1x1_prelu_nchw(x3, w, b, alpha):
    """x3: (N, Cin, HW); w: (Cout, Cin); b: (Cout,); alpha: scalar."""
    N, Cin, HW = x3.shape
    Cout = w.shape[0]
    ts = _pick_spatial_tile(HW)
    return pl.pallas_call(
        _conv1x1_prelu_kernel,
        out_shape=jax.ShapeDtypeStruct((N, Cout, HW), jnp.float32),
        grid=(N, HW // ts),
        in_specs=[
            pl.BlockSpec(memory_space=pltpu.MemorySpace.SMEM),
            pl.BlockSpec(memory_space=pltpu.MemorySpace.SMEM),
            pl.BlockSpec(memory_space=pltpu.MemorySpace.SMEM),
            pl.BlockSpec((None, Cin, ts), lambda n, s: (n, 0, s)),
        ],
        out_specs=pl.BlockSpec((None, Cout, ts), lambda n, s: (n, 0, s)),
        compiler_params=pltpu.CompilerParams(
            dimension_semantics=("parallel", "parallel")),
    )(
        w.astype(jnp.float32),
        b.astype(jnp.float32),
        jnp.asarray(alpha, jnp.float32).reshape(1),
        x3.astype(jnp.float32),
    )


def pixel_shuffle(x, r=2):
    """x: (N, C, H, W) -> (N, C // r^2, H*r, W*r)  (matches nn.PixelShuffle)."""
    N, C, H, W = x.shape
    co = C // (r * r)
    x = x.reshape(N, co, r, r, H, W)
    x = x.transpose(0, 1, 4, 2, 5, 3)
    return x.reshape(N, co, H * r, W * r)


# ----------------------------------------------------------------------------
# Dispatcher
# ----------------------------------------------------------------------------

def up_forward(x_nchw, w_conv, b_conv, prelu_alpha):
    """Full `_up.forward`: conv1x1 -> PReLU -> PixelShuffle(2)."""
    N, C, H, W = x_nchw.shape
    if W <= 64:
        # Fully fused single-pass kernel (scatter matmul cost ~4W MACs/elem
        # stays below the HBM roofline).
        return up_forward_fused(x_nchw, w_conv, b_conv, prelu_alpha)
    # TODO(synk): for wide feature maps the width interleave of PixelShuffle
    # is left to a single XLA transpose pass (scatter matmul would dominate).
    x3 = x_nchw.reshape(N, C, H * W)
    y3 = conv1x1_prelu_nchw(x3, w_conv.reshape(C, C), b_conv, prelu_alpha)
    return pixel_shuffle(y3.reshape(N, C, H, W), r=2)


if __name__ == "__main__":
    key = jax.random.PRNGKey(0)
    k_x, k_w, k_b = jax.random.split(key, 3)

    N, C, H, W = 2, 4, 16, 16   # channel_in = 4 (divisible by 4 for PixelShuffle)

    x = jax.random.normal(k_x, (N, C, H, W), dtype=jnp.float32)

    # Deterministic synthetic parameters (shapes of nn.Conv2d(C, C, 1) / nn.PReLU())
    fan_in = C                                  # kernel_size = 1
    bound = 1.0 / (fan_in ** 0.5)
    w_conv = jax.random.uniform(k_w, (C, C, 1, 1), jnp.float32, -bound, bound)
    b_conv = jax.random.uniform(k_b, (C,), jnp.float32, -bound, bound)
    prelu_alpha = jnp.float32(0.25)             # PyTorch PReLU default init

    out = up_forward(x, w_conv, b_conv, prelu_alpha)
    out = jax.block_until_ready(out)

    # Pure-JAX reference.
    y_ref = jnp.einsum("nchw,oc->nohw", x, w_conv.reshape(C, C)) \
        + b_conv[None, :, None, None]
    y_ref = jnp.where(y_ref > 0, y_ref, prelu_alpha * y_ref)
    out_ref = pixel_shuffle(y_ref, 2)

    assert out.shape == (N, C // 4, 2 * H, 2 * W), out.shape
    assert jnp.allclose(out, out_ref, atol=1e-5), \
        float(jnp.max(jnp.abs(out - out_ref)))

    print("KERNEL_OK")
</pallas_src>

<mosaic_0001>
module attributes {stable_mosaic.version = 11 : i64} {
  func.func @_up_fused_kernel(%arg0: i32, %arg1: i32, %arg2: i32, %arg3: memref<4x4xf32, #tpu.memory_space<smem>>, %arg4: memref<4xf32, #tpu.memory_space<smem>>, %arg5: memref<1xf32, #tpu.memory_space<smem>>, %arg6: memref<4x16x64xf32, #tpu.memory_space<vmem>>, %arg7: memref<1x4x16x16xf32, #tpu.memory_space<vmem>>, %arg8: memref<1x1x16x64xf32, #tpu.memory_space<vmem>>) attributes {dimension_semantics = [#tpu.dimension_semantics<parallel>, #tpu.dimension_semantics<parallel>, #tpu.dimension_semantics<parallel>], iteration_bounds = array<i64: 2, 1, 1>, scalar_prefetch = 0 : i64, scratch_operands = 0 : i64, tpu.core_type = #tpu.core_type<tc>, window_params = [{transform_indices = @transform_0, window_bounds = array<i64: 4, 4>}, {transform_indices = @transform_1, window_bounds = array<i64: 4>}, {transform_indices = @transform_2, window_bounds = array<i64: 1>}, {pipeline_mode = #tpu.pipeline_mode<synchronous>, transform_indices = @transform_3, window_bounds = array<i64: 4, 16, 64>}, {transform_indices = @transform_4, window_bounds = array<i64: 1, 4, 16, 16>}, {transform_indices = @transform_5, window_bounds = array<i64: 1, 1, 16, 64>}]} {
    %c0 = arith.constant 0 : index
    %0 = memref.load %arg5[%c0] : memref<1xf32, #tpu.memory_space<smem>>
    %c0_0 = arith.constant 0 : index
    %c0_1 = arith.constant 0 : index
    %c0_2 = arith.constant 0 : index
    %c0_3 = arith.constant 0 : index
    %1 = vector.load %arg7[%c0_0, %c0_1, %c0_2, %c0_3] : memref<1x4x16x16xf32, #tpu.memory_space<vmem>>, vector<1x4x16x16xf32>
    %2 = vector.shape_cast %1 : vector<1x4x16x16xf32> to vector<4x16x16xf32>
    %c4_i32 = arith.constant 4 : i32
    %3 = arith.muli %c4_i32, %arg2 : i32
    %c0_i32 = arith.constant 0 : i32
    %4 = arith.addi %3, %c0_i32 : i32
    %5 = vector.extract_strided_slice %2 {offsets = [0, 0, 0], sizes = [1, 16, 16], strides = [1, 1, 1]} : vector<4x16x16xf32> to vector<1x16x16xf32>
    %6 = vector.shape_cast %5 : vector<1x16x16xf32> to vector<16x16xf32>
    %7 = arith.index_cast %4 : i32 to index
    %c0_4 = arith.constant 0 : index
    %8 = memref.load %arg3[%7, %c0_4] : memref<4x4xf32, #tpu.memory_space<smem>>
    %9 = vector.broadcast %8 : f32 to vector<16x16xf32>
    %10 = arith.mulf %6, %9 : vector<16x16xf32>
    %11 = vector.extract_strided_slice %2 {offsets = [1, 0, 0], sizes = [1, 16, 16], strides = [1, 1, 1]} : vector<4x16x16xf32> to vector<1x16x16xf32>
    %12 = vector.shape_cast %11 : vector<1x16x16xf32> to vector<16x16xf32>
    %13 = arith.index_cast %4 : i32 to index
    %c1 = arith.constant 1 : index
    %14 = memref.load %arg3[%13, %c1] : memref<4x4xf32, #tpu.memory_space<smem>>
    %15 = vector.broadcast %14 : f32 to vector<16x16xf32>
    %16 = arith.mulf %12, %15 : vector<16x16xf32>
    %17 = arith.addf %10, %16 : vector<16x16xf32>
    %18 = vector.extract_strided_slice %2 {offsets = [2, 0, 0], sizes = [1, 16, 16], strides = [1, 1, 1]} : vector<4x16x16xf32> to vector<1x16x16xf32>
    %19 = vector.shape_cast %18 : vector<1x16x16xf32> to vector<16x16xf32>
    %20 = arith.index_cast %4 : i32 to index
    %c2 = arith.constant 2 : index
    %21 = memref.load %arg3[%20, %c2] : memref<4x4xf32, #tpu.memory_space<smem>>
    %22 = vector.broadcast %21 : f32 to vector<16x16xf32>
    %23 = arith.mulf %19, %22 : vector<16x16xf32>
    %24 = arith.addf %17, %23 : vector<16x16xf32>
    %25 = vector.extract_strided_slice %2 {offsets = [3, 0, 0], sizes = [1, 16, 16], strides = [1, 1, 1]} : vector<4x16x16xf32> to vector<1x16x16xf32>
    %26 = vector.shape_cast %25 : vector<1x16x16xf32> to vector<16x16xf32>
    %27 = arith.index_cast %4 : i32 to index
    %c3 = arith.constant 3 : index
    %28 = memref.load %arg3[%27, %c3] : memref<4x4xf32, #tpu.memory_space<smem>>
    %29 = vector.broadcast %28 : f32 to vector<16x16xf32>
    %30 = arith.mulf %26, %29 : vector<16x16xf32>
    %31 = arith.addf %24, %30 : vector<16x16xf32>
    %32 = arith.index_cast %4 : i32 to index
    %33 = memref.load %arg4[%32] : memref<4xf32, #tpu.memory_space<smem>>
    %34 = vector.broadcast %33 : f32 to vector<16x16xf32>
    %35 = arith.addf %31, %34 : vector<16x16xf32>
    %cst = arith.constant 0.000000e+00 : f32
    %36 = vector.broadcast %cst : f32 to vector<16x16xf32>
    %37 = arith.cmpf ogt, %35, %36 : vector<16x16xf32>
    %38 = vector.broadcast %0 : f32 to vector<16x16xf32>
    %39 = arith.mulf %38, %35 : vector<16x16xf32>
    %40 = arith.select %37, %35, %39 : vector<16x16xi1>, vector<16x16xf32>
    %c0_5 = arith.constant 0 : index
    %c0_6 = arith.constant 0 : index
    %c0_7 = arith.constant 0 : index
    %41 = vector.load %arg6[%c0_5, %c0_6, %c0_7] : memref<4x16x64xf32, #tpu.memory_space<vmem>>, vector<1x16x64xf32>
    %42 = vector.shape_cast %41 : vector<1x16x64xf32> to vector<16x64xf32>
    %cst_8 = arith.constant dense<0.000000e+00> : vector<16x64xf32>
    %43 = tpu.matmul %40, %42, %cst_8 {dimension_numbers = #tpu.dot_dimension_numbers<[1], [0], [0], [1], [0, 0, 1, 1], [], []>} : vector<16x16xf32>, vector<16x64xf32>, vector<16x64xf32> -> vector<16x64xf32>
    %c4_i32_9 = arith.constant 4 : i32
    %44 = arith.muli %c4_i32_9, %arg2 : i32
    %c1_i32 = arith.constant 1 : i32
    %45 = arith.addi %44, %c1_i32 : i32
    %46 = vector.extract_strided_slice %2 {offsets = [0, 0, 0], sizes = [1, 16, 16], strides = [1, 1, 1]} : vector<4x16x16xf32> to vector<1x16x16xf32>
    %47 = vector.shape_cast %46 : vector<1x16x16xf32> to vector<16x16xf32>
    %48 = arith.index_cast %45 : i32 to index
    %c0_10 = arith.constant 0 : index
    %49 = memref.load %arg3[%48, %c0_10] : memref<4x4xf32, #tpu.memory_space<smem>>
    %50 = vector.broadcast %49 : f32 to vector<16x16xf32>
    %51 = arith.mulf %47, %50 : vector<16x16xf32>
    %52 = vector.extract_strided_slice %2 {offsets = [1, 0, 0], sizes = [1, 16, 16], strides = [1, 1, 1]} : vector<4x16x16xf32> to vector<1x16x16xf32>
    %53 = vector.shape_cast %52 : vector<1x16x16xf32> to vector<16x16xf32>
    %54 = arith.index_cast %45 : i32 to index
    %c1_11 = arith.constant 1 : index
    %55 = memref.load %arg3[%54, %c1_11] : memref<4x4xf32, #tpu.memory_space<smem>>
    %56 = vector.broadcast %55 : f32 to vector<16x16xf32>
    %57 = arith.mulf %53, %56 : vector<16x16xf32>
    %58 = arith.addf %51, %57 : vector<16x16xf32>
    %59 = vector.extract_strided_slice %2 {offsets = [2, 0, 0], sizes = [1, 16, 16], strides = [1, 1, 1]} : vector<4x16x16xf32> to vector<1x16x16xf32>
    %60 = vector.shape_cast %59 : vector<1x16x16xf32> to vector<16x16xf32>
    %61 = arith.index_cast %45 : i32 to index
    %c2_12 = arith.constant 2 : index
    %62 = memref.load %arg3[%61, %c2_12] : memref<4x4xf32, #tpu.memory_space<smem>>
    %63 = vector.broadcast %62 : f32 to vector<16x16xf32>
    %64 = arith.mulf %60, %63 : vector<16x16xf32>
    %65 = arith.addf %58, %64 : vector<16x16xf32>
    %66 = vector.extract_strided_slice %2 {offsets = [3, 0, 0], sizes = [1, 16, 16], strides = [1, 1, 1]} : vector<4x16x16xf32> to vector<1x16x16xf32>
    %67 = vector.shape_cast %66 : vector<1x16x16xf32> to vector<16x16xf32>
    %68 = arith.index_cast %45 : i32 to index
    %c3_13 = arith.constant 3 : index
    %69 = memref.load %arg3[%68, %c3_13] : memref<4x4xf32, #tpu.memory_space<smem>>
    %70 = vector.broadcast %69 : f32 to vector<16x16xf32>
    %71 = arith.mulf %67, %70 : vector<16x16xf32>
    %72 = arith.addf %65, %71 : vector<16x16xf32>
    %73 = arith.index_cast %45 : i32 to index
    %74 = memref.load %arg4[%73] : memref<4xf32, #tpu.memory_space<smem>>
    %75 = vector.broadcast %74 : f32 to vector<16x16xf32>
    %76 = arith.addf %72, %75 : vector<16x16xf32>
    %cst_14 = arith.constant 0.000000e+00 : f32
    %77 = vector.broadcast %cst_14 : f32 to vector<16x16xf32>
    %78 = arith.cmpf ogt, %76, %77 : vector<16x16xf32>
    %79 = vector.broadcast %0 : f32 to vector<16x16xf32>
    %80 = arith.mulf %79, %76 : vector<16x16xf32>
    %81 = arith.select %78, %76, %80 : vector<16x16xi1>, vector<16x16xf32>
    %c1_15 = arith.constant 1 : index
    %c0_16 = arith.constant 0 : index
    %c0_17 = arith.constant 0 : index
    %82 = vector.load %arg6[%c1_15, %c0_16, %c0_17] : memref<4x16x64xf32, #tpu.memory_space<vmem>>, vector<1x16x64xf32>
    %83 = vector.shape_cast %82 : vector<1x16x64xf32> to vector<16x64xf32>
    %cst_18 = arith.constant dense<0.000000e+00> : vector<16x64xf32>
    %84 = tpu.matmul %81, %83, %cst_18 {dimension_numbers = #tpu.dot_dimension_numbers<[1], [0], [0], [1], [0, 0, 1, 1], [], []>} : vector<16x16xf32>, vector<16x64xf32>, vector<16x64xf32> -> vector<16x64xf32>
    %85 = arith.addf %43, %84 : vector<16x64xf32>
    %c4_i32_19 = arith.constant 4 : i32
    %86 = arith.muli %c4_i32_19, %arg2 : i32
    %c2_i32 = arith.constant 2 : i32
    %87 = arith.addi %86, %c2_i32 : i32
    %88 = vector.extract_strided_slice %2 {offsets = [0, 0, 0], sizes = [1, 16, 16], strides = [1, 1, 1]} : vector<4x16x16xf32> to vector<1x16x16xf32>
    %89 = vector.shape_cast %88 : vector<1x16x16xf32> to vector<16x16xf32>
    %90 = arith.index_cast %87 : i32 to index
    %c0_20 = arith.constant 0 : index
    %91 = memref.load %arg3[%90, %c0_20] : memref<4x4xf32, #tpu.memory_space<smem>>
    %92 = vector.broadcast %91 : f32 to vector<16x16xf32>
    %93 = arith.mulf %89, %92 : vector<16x16xf32>
    %94 = vector.extract_strided_slice %2 {offsets = [1, 0, 0], sizes = [1, 16, 16], strides = [1, 1, 1]} : vector<4x16x16xf32> to vector<1x16x16xf32>
    %95 = vector.shape_cast %94 : vector<1x16x16xf32> to vector<16x16xf32>
    %96 = arith.index_cast %87 : i32 to index
    %c1_21 = arith.constant 1 : index
    %97 = memref.load %arg3[%96, %c1_21] : memref<4x4xf32, #tpu.memory_space<smem>>
    %98 = vector.broadcast %97 : f32 to vector<16x16xf32>
    %99 = arith.mulf %95, %98 : vector<16x16xf32>
    %100 = arith.addf %93, %99 : vector<16x16xf32>
    %101 = vector.extract_strided_slice %2 {offsets = [2, 0, 0], sizes = [1, 16, 16], strides = [1, 1, 1]} : vector<4x16x16xf32> to vector<1x16x16xf32>
    %102 = vector.shape_cast %101 : vector<1x16x16xf32> to vector<16x16xf32>
    %103 = arith.index_cast %87 : i32 to index
    %c2_22 = arith.constant 2 : index
    %104 = memref.load %arg3[%103, %c2_22] : memref<4x4xf32, #tpu.memory_space<smem>>
    %105 = vector.broadcast %104 : f32 to vector<16x16xf32>
    %106 = arith.mulf %102, %105 : vector<16x16xf32>
    %107 = arith.addf %100, %106 : vector<16x16xf32>
    %108 = vector.extract_strided_slice %2 {offsets = [3, 0, 0], sizes = [1, 16, 16], strides = [1, 1, 1]} : vector<4x16x16xf32> to vector<1x16x16xf32>
    %109 = vector.shape_cast %108 : vector<1x16x16xf32> to vector<16x16xf32>
    %110 = arith.index_cast %87 : i32 to index
    %c3_23 = arith.constant 3 : index
    %111 = memref.load %arg3[%110, %c3_23] : memref<4x4xf32, #tpu.memory_space<smem>>
    %112 = vector.broadcast %111 : f32 to vector<16x16xf32>
    %113 = arith.mulf %109, %112 : vector<16x16xf32>
    %114 = arith.addf %107, %113 : vector<16x16xf32>
    %115 = arith.index_cast %87 : i32 to index
    %116 = memref.load %arg4[%115] : memref<4xf32, #tpu.memory_space<smem>>
    %117 = vector.broadcast %116 : f32 to vector<16x16xf32>
    %118 = arith.addf %114, %117 : vector<16x16xf32>
    %cst_24 = arith.constant 0.000000e+00 : f32
    %119 = vector.broadcast %cst_24 : f32 to vector<16x16xf32>
    %120 = arith.cmpf ogt, %118, %119 : vector<16x16xf32>
    %121 = vector.broadcast %0 : f32 to vector<16x16xf32>
    %122 = arith.mulf %121, %118 : vector<16x16xf32>
    %123 = arith.select %120, %118, %122 : vector<16x16xi1>, vector<16x16xf32>
    %c2_25 = arith.constant 2 : index
    %c0_26 = arith.constant 0 : index
    %c0_27 = arith.constant 0 : index
    %124 = vector.load %arg6[%c2_25, %c0_26, %c0_27] : memref<4x16x64xf32, #tpu.memory_space<vmem>>, vector<1x16x64xf32>
    %125 = vector.shape_cast %124 : vector<1x16x64xf32> to vector<16x64xf32>
    %cst_28 = arith.constant dense<0.000000e+00> : vector<16x64xf32>
    %126 = tpu.matmul %123, %125, %cst_28 {dimension_numbers = #tpu.dot_dimension_numbers<[1], [0], [0], [1], [0, 0, 1, 1], [], []>} : vector<16x16xf32>, vector<16x64xf32>, vector<16x64xf32> -> vector<16x64xf32>
    %127 = arith.addf %85, %126 : vector<16x64xf32>
    %c4_i32_29 = arith.constant 4 : i32
    %128 = arith.muli %c4_i32_29, %arg2 : i32
    %c3_i32 = arith.constant 3 : i32
    %129 = arith.addi %128, %c3_i32 : i32
    %130 = vector.extract_strided_slice %2 {offsets = [0, 0, 0], sizes = [1, 16, 16], strides = [1, 1, 1]} : vector<4x16x16xf32> to vector<1x16x16xf32>
    %131 = vector.shape_cast %130 : vector<1x16x16xf32> to vector<16x16xf32>
    %132 = arith.index_cast %129 : i32 to index
    %c0_30 = arith.constant 0 : index
    %133 = memref.load %arg3[%132, %c0_30] : memref<4x4xf32, #tpu.memory_space<smem>>
    %134 = vector.broadcast %133 : f32 to vector<16x16xf32>
    %135 = arith.mulf %131, %134 : vector<16x16xf32>
    %136 = vector.extract_strided_slice %2 {offsets = [1, 0, 0], sizes = [1, 16, 16], strides = [1, 1, 1]} : vector<4x16x16xf32> to vector<1x16x16xf32>
    %137 = vector.shape_cast %136 : vector<1x16x16xf32> to vector<16x16xf32>
    %138 = arith.index_cast %129 : i32 to index
    %c1_31 = arith.constant 1 : index
    %139 = memref.load %arg3[%138, %c1_31] : memref<4x4xf32, #tpu.memory_space<smem>>
    %140 = vector.broadcast %139 : f32 to vector<16x16xf32>
    %141 = arith.mulf %137, %140 : vector<16x16xf32>
    %142 = arith.addf %135, %141 : vector<16x16xf32>
    %143 = vector.extract_strided_slice %2 {offsets = [2, 0, 0], sizes = [1, 16, 16], strides = [1, 1, 1]} : vector<4x16x16xf32> to vector<1x16x16xf32>
    %144 = vector.shape_cast %143 : vector<1x16x16xf32> to vector<16x16xf32>
    %145 = arith.index_cast %129 : i32 to index
    %c2_32 = arith.constant 2 : index
    %146 = memref.load %arg3[%145, %c2_32] : memref<4x4xf32, #tpu.memory_space<smem>>
    %147 = vector.broadcast %146 : f32 to vector<16x16xf32>
    %148 = arith.mulf %144, %147 : vector<16x16xf32>
    %149 = arith.addf %142, %148 : vector<16x16xf32>
    %150 = vector.extract_strided_slice %2 {offsets = [3, 0, 0], sizes = [1, 16, 16], strides = [1, 1, 1]} : vector<4x16x16xf32> to vector<1x16x16xf32>
    %151 = vector.shape_cast %150 : vector<1x16x16xf32> to vector<16x16xf32>
    %152 = arith.index_cast %129 : i32 to index
    %c3_33 = arith.constant 3 : index
    %153 = memref.load %arg3[%152, %c3_33] : memref<4x4xf32, #tpu.memory_space<smem>>
    %154 = vector.broadcast %153 : f32 to vector<16x16xf32>
    %155 = arith.mulf %151, %154 : vector<16x16xf32>
    %156 = arith.addf %149, %155 : vector<16x16xf32>
    %157 = arith.index_cast %129 : i32 to index
    %158 = memref.load %arg4[%157] : memref<4xf32, #tpu.memory_space<smem>>
    %159 = vector.broadcast %158 : f32 to vector<16x16xf32>
    %160 = arith.addf %156, %159 : vector<16x16xf32>
    %cst_34 = arith.constant 0.000000e+00 : f32
    %161 = vector.broadcast %cst_34 : f32 to vector<16x16xf32>
    %162 = arith.cmpf ogt, %160, %161 : vector<16x16xf32>
    %163 = vector.broadcast %0 : f32 to vector<16x16xf32>
    %164 = arith.mulf %163, %160 : vector<16x16xf32>
    %165 = arith.select %162, %160, %164 : vector<16x16xi1>, vector<16x16xf32>
    %c3_35 = arith.constant 3 : index
    %c0_36 = arith.constant 0 : index
    %c0_37 = arith.constant 0 : index
    %166 = vector.load %arg6[%c3_35, %c0_36, %c0_37] : memref<4x16x64xf32, #tpu.memory_space<vmem>>, vector<1x16x64xf32>
    %167 = vector.shape_cast %166 : vector<1x16x64xf32> to vector<16x64xf32>
    %cst_38 = arith.constant dense<0.000000e+00> : vector<16x64xf32>
    %168 = tpu.matmul %165, %167, %cst_38 {dimension_numbers = #tpu.dot_dimension_numbers<[1], [0], [0], [1], [0, 0, 1, 1], [], []>} : vector<16x16xf32>, vector<16x64xf32>, vector<16x64xf32> -> vector<16x64xf32>
    %169 = arith.addf %127, %168 : vector<16x64xf32>
    %c0_39 = arith.constant 0 : index
    %c0_40 = arith.constant 0 : index
    %c0_41 = arith.constant 0 : index
    %c0_42 = arith.constant 0 : index
    %170 = vector.load %arg8[%c0_39, %c0_40, %c0_41, %c0_42] : memref<1x1x16x64xf32, #tpu.memory_space<vmem>>, vector<1x1x16x64xf32>
    %171 = vector.shape_cast %170 : vector<1x1x16x64xf32> to vector<16x64xf32>
    %172 = vector.shape_cast %169 : vector<16x64xf32> to vector<1x1x16x64xf32>
    tpu.vector_store %arg8[%c0_39, %c0_40, %c0_41, %c0_42], %172 {strides = array<i32>} : memref<1x1x16x64xf32, #tpu.memory_space<vmem>>, vector<1x1x16x64xf32>,
    return
  }
  func.func @transform_0(%arg0: i32, %arg1: i32, %arg2: i32) -> (i32, i32) {
    %c0_i32 = arith.constant 0 : i32
    %c0_i32_0 = arith.constant 0 : i32
    %c0_i32_1 = arith.constant 0 : i32
    return %c0_i32, %c0_i32_0 : i32, i32
  }
  func.func @transform_1(%arg0: i32, %arg1: i32, %arg2: i32) -> i32 {
    %c0_i32 = arith.constant 0 : i32
    %c0_i32_0 = arith.constant 0 : i32
    return %c0_i32 : i32
  }
  func.func @transform_2(%arg0: i32, %arg1: i32, %arg2: i32) -> i32 {
    %c0_i32 = arith.constant 0 : i32
    %c0_i32_0 = arith.constant 0 : i32
    return %c0_i32 : i32
  }
  func.func @transform_3(%arg0: i32, %arg1: i32, %arg2: i32) -> (i32, i32, i32) {
    %c0_i32 = arith.constant 0 : i32
    %c0_i32_0 = arith.constant 0 : i32
    %c0_i32_1 = arith.constant 0 : i32
    %c0_i32_2 = arith.constant 0 : i32
    return %c0_i32, %c0_i32_0, %c0_i32_1 : i32, i32, i32
  }
  func.func @transform_4(%arg0: i32, %arg1: i32, %arg2: i32) -> (i32, i32, i32, i32) {
    %c0_i32 = arith.constant 0 : i32
    %c0_i32_0 = arith.constant 0 : i32
    %c0_i32_1 = arith.constant 0 : i32
    return %arg0, %c0_i32, %arg1, %c0_i32_0 : i32, i32, i32, i32
  }
  func.func @transform_5(%arg0: i32, %arg1: i32, %arg2: i32) -> (i32, i32, i32, i32) {
    %c0_i32 = arith.constant 0 : i32
    %c0_i32_0 = arith.constant 0 : i32
    return %arg0, %arg2, %arg1, %c0_i32 : i32, i32, i32, i32
  }
}

</mosaic_0001>

<llo_original>
// kernel: tpu_custom_call.1
$region0: #{tpu_custom_call.1}
  #allocation0 [shape = 'u32[]', space=smem, size = 0x4, offset = 0x4, fixed_abs, tag = 'smem constant byte address 0x4 - core index']
  #allocation1 [shape = 'u32[144,128]{1,0:T(1,128)}', space=vmem, size = 0x12000, scoped, tag = 'internal scratch']
  #allocation2 [shape = 'f32[1]{0:T(128)S(6)}', space=smem, size = 0x200, scoped, tag = 'scoped memory for tpu_custom_call.1']
  %s0 = inlined_call_operand.hbm [shape: f32[4,4], index: 0, kind: input, shape index: {}]
  %s1 = inlined_call_operand.vmem [shape: f32[4], index: 1, kind: input, shape index: {}]
  %s2 = inlined_call_operand.<no memory space> [shape: f32[1], index: 2, kind: input, shape index: {}]
  %s3 = inlined_call_operand.hbm [shape: f32[4,16,64], index: 3, kind: input, shape index: {}]
  %s4 = inlined_call_operand.hbm [shape: f32[2,4,16,16], index: 4, kind: input, shape index: {}]
  %s5 = inlined_call_operand.hbm [shape: f32[2,1,16,64], index: 5, kind: output, shape index: {}]
  %s6 = sld [smem:[#allocation0]]
  $region69: #{tpu_custom_call.1} parent=0
    _
  %s8 = ssub.s32 1, %s6
  %s9 = scalar_select 0, %s8, %s6
  %10 = sst [smem:[#allocation2]] %s2
  $region1: #{tpu_custom_call.1} parent=0
    #allocation3 [shape = 'u8[2048]{0}', space=smem, size = 0x800, scoped, tag = 'input window, operand 0, single buffered']
    #allocation4 [shape = 's32[2]{0}', space=sflag, size = 0x8, scoped, tag = 'scoped memory for tpu_custom_call.1']
    #allocation5 [shape = 's32[2]{0}', space=sflag, size = 0x8, scoped, tag = 'scoped memory for tpu_custom_call.1']
    #allocation6 [shape = 's32[2]{0}', space=sflag, size = 0x8, scoped, tag = 'scoped memory for tpu_custom_call.1']
    #allocation7 [shape = 's32[2]{0}', space=sflag, size = 0x8, scoped, tag = 'scoped memory for tpu_custom_call.1']
    #allocation8 [shape = 'u8[512]{0}', space=smem, size = 0x200, scoped, tag = 'input window, operand 1, single buffered']
    #allocation9 [shape = 'u8[32768]{0}', space=vmem, size = 0x8000, scoped, tag = 'input window, operand 3, single buffered']
    #allocation10 [shape = 'u8[65536]{0}', space=vmem, size = 0x10000, scoped, tag = 'input window, operand 4']
    #allocation11 [shape = 's32[2]{0}', space=sflag, size = 0x8, scoped, tag = 'scoped memory for tpu_custom_call.1']
    #allocation12 [shape = 'u8[16384]{0}', space=vmem, size = 0x4000, scoped, tag = 'output window, operand 0']
    %11 = vsyncpa [#allocation6], 0
    %12 = vsyncpa [#allocation7], 0
    %13 = vsyncpa [#allocation4], 0
    %14 = vsyncpa [#allocation11], 0
    %s15 = scalar_lea.sflag [#allocation11], 1
    %16 = vsyncpa %s15, 0
    %17 = vsyncpa [#allocation5], 0
    %s18 = scalar_lea.sflag [#allocation5], 1
    %19 = vsyncpa %s18, 0
    loop: start=0, step=1, limit=4
    $region2: #{tpu_custom_call.1} parent=1 // loop_pre_header
      _
    $region3: #{tpu_custom_call.1} parent=1 // loop_header
      %s21 = sphi 0, %s25
      %p22 = scmp.ge.s32.totalorder %s21, 4
      %s28 = sphi 0, %s47
      %s29 = sphi 0, %s43
      %s30 = sphi 0, %s39
      %s31 = sphi 0, %s28
      %s32 = sphi 0, %s29
      %s33 = sphi 0, %s30
      %s34 = sphi 0, %s31
      %s35 = sphi 0, %s32
      %s36 = sphi 0, %s33
      %s48 = sphi 0, %s48
      %s50 = sphi 0, %s48
      %s51 = sphi 0, %s50
      %s65 = sphi 0, %s51
      %s69 = sphi 0, %s69
      %s71 = sphi 0, %s69
      %s72 = sphi 0, %s71
      %s86 = sphi 0, %s72
      %s90 = sphi 0, %s90
      %s92 = sphi 0, %s90
      %s93 = sphi 0, %s92
      %s107 = sphi 0, %s93
      %s111 = sphi 0, %s111
      %s113 = sphi 0, %s111
      %s114 = sphi 0, %s113
      %s128 = sphi 0, %s114
      %s136 = sphi 0, %s138
      %s139 = sphi 0, %s136
      %s140 = sphi 0, %s139
      %s156 = sphi 0, %s140
      %s166 = sphi 0, %s168
      %s169 = sphi 0, %s166
      %s170 = sphi 0, %s169
      %s186 = sphi 0, %s170
    $region4: #{tpu_custom_call.1} parent=1 // loop_header_branch
      %24 = sbr.rel (%p22) target = $region8
    $region5: #{tpu_custom_call.1} parent=1 // loop_body
      %s26 = ssub.s32 %s21, 1
      %s27 = ssub.s32 %s21, 2
      %s37 = sadd.s32 1, %s30
      %p38 = scmp.ge.s32.totalorder %s37, 1
      %s39 = scalar_select %p38, 0, %s37
      %s40 = sadd.s32 1, %s29
      %s41 = scalar_select %p38, %s40, %s29
      %p42 = scmp.ge.s32.totalorder %s41, 1
      %s43 = scalar_select %p42, 0, %s41
      %s44 = sadd.s32 1, %s28
      %s45 = scalar_select %p42, %s44, %s28
      %p46 = scmp.ge.s32.totalorder %s45, 2
      %s47 = scalar_select %p46, 0, %s45
      %s49 = sadd.s32 %s48, 1
      %p52 = scmp.eq.s32.totalorder %s21, 1
      %p53 = scmp.ne.s32.totalorder %s48, %s50
      %p54 = scmp.eq.s32.totalorder %s21, 0
      %p55 = por %p53, %p54
      %p56 = scmp.ne.s32.totalorder %s48, %s50
      %p57 = scmp.eq.s32.totalorder %s26, 1
      %p58 = por %p56, %p57
      %p59 = scmp.ne.s32.totalorder %s50, %s51
      %p60 = scmp.eq.s32.totalorder %s26, 0
      %p61 = por %p59, %p60
      %p62 = scmp.ne.s32.totalorder %s50, %s51
      %p63 = scmp.eq.s32.totalorder %s27, 1
      %p64 = por %p62, %p63
      %p66 = scmp.ne.s32.totalorder %s51, %s65
      %p67 = scmp.eq.s32.totalorder %s27, 0
      %p68 = por %p66, %p67
      %s70 = sadd.s32 %s69, 1
      %p73 = scmp.eq.s32.totalorder %s21, 1
      %p74 = scmp.ne.s32.totalorder %s69, %s71
      %p75 = scmp.eq.s32.totalorder %s21, 0
      %p76 = por %p74, %p75
      %p77 = scmp.ne.s32.totalorder %s69, %s71
      %p78 = scmp.eq.s32.totalorder %s26, 1
      %p79 = por %p77, %p78
      %p80 = scmp.ne.s32.totalorder %s71, %s72
      %p81 = scmp.eq.s32.totalorder %s26, 0
      %p82 = por %p80, %p81
      %p83 = scmp.ne.s32.totalorder %s71, %s72
      %p84 = scmp.eq.s32.totalorder %s27, 1
      %p85 = por %p83, %p84
      %p87 = scmp.ne.s32.totalorder %s72, %s86
      %p88 = scmp.eq.s32.totalorder %s27, 0
      %p89 = por %p87, %p88
      %s91 = sadd.s32 %s90, 1
      %p94 = scmp.eq.s32.totalorder %s21, 1
      %p95 = scmp.ne.s32.totalorder %s90, %s92
      %p96 = scmp.eq.s32.totalorder %s21, 0
      %p97 = por %p95, %p96
      %p98 = scmp.ne.s32.totalorder %s90, %s92
      %p99 = scmp.eq.s32.totalorder %s26, 1
      %p100 = por %p98, %p99
      %p101 = scmp.ne.s32.totalorder %s92, %s93
      %p102 = scmp.eq.s32.totalorder %s26, 0
      %p103 = por %p101, %p102
      %p104 = scmp.ne.s32.totalorder %s92, %s93
      %p105 = scmp.eq.s32.totalorder %s27, 1
      %p106 = por %p104, %p105
      %p108 = scmp.ne.s32.totalorder %s93, %s107
      %p109 = scmp.eq.s32.totalorder %s27, 0
      %p110 = por %p108, %p109
      %s112 = sadd.s32 %s111, 1
      %p115 = scmp.eq.s32.totalorder %s21, 1
      %p116 = scmp.ne.s32.totalorder %s111, %s113
      %p117 = scmp.eq.s32.totalorder %s21, 0
      %p118 = por %p116, %p117
      %p119 = scmp.ne.s32.totalorder %s111, %s113
      %p120 = scmp.eq.s32.totalorder %s26, 1
      %p121 = por %p119, %p120
      %p122 = scmp.ne.s32.totalorder %s113, %s114
      %p123 = scmp.eq.s32.totalorder %s26, 0
      %p124 = por %p122, %p123
      %p125 = scmp.ne.s32.totalorder %s113, %s114
      %p126 = scmp.eq.s32.totalorder %s27, 1
      %p127 = por %p125, %p126
      %p129 = scmp.ne.s32.totalorder %s114, %s128
      %p130 = scmp.eq.s32.totalorder %s27, 0
      %p131 = por %p129, %p130
      %s132 = ssub.s32 %s28, %s47
      %s133 = ssub.s32 %s29, %s43
      %s134 = sor.u32 %s132, %s133
      %p135 = scmp.eq.s32.totalorder %s134, 0
      %s137 = sadd.s32 %s136, 1
      %s138 = scalar_select %p135, %s136, %s137
      %p141 = pneg %p135
      %p142 = scmp.eq.s32.totalorder %s21, 1
      %p143 = por %p141, %p142
      %p144 = scmp.ne.s32.totalorder %s136, %s139
      %p145 = scmp.eq.s32.totalorder %s21, 0
      %p146 = por %p144, %p145
      %p147 = scmp.ne.s32.totalorder %s136, %s139
      %p148 = scmp.eq.s32.totalorder %s26, 1
      %p149 = por %p147, %p148
      %p150 = scmp.ne.s32.totalorder %s139, %s140
      %p151 = scmp.eq.s32.totalorder %s26, 0
      %p152 = por %p150, %p151
      %p153 = scmp.ne.s32.totalorder %s139, %s140
      %p154 = scmp.eq.s32.totalorder %s27, 1
      %p155 = por %p153, %p154
      %p157 = scmp.ne.s32.totalorder %s140, %s156
      %p158 = scmp.eq.s32.totalorder %s27, 0
      %p159 = por %p157, %p158
      %s160 = ssub.s32 %s28, %s47
      %s161 = ssub.s32 %s30, %s39
      %s162 = sor.u32 %s160, %s161
      %s163 = ssub.s32 %s29, %s43
      %s164 = sor.u32 %s162, %s163
      %p165 = scmp.eq.s32.totalorder %s164, 0
      %s167 = sadd.s32 %s166, 1
      %s168 = scalar_select %p165, %s166, %s167
      %p171 = pneg %p165
      %p172 = scmp.eq.s32.totalorder %s21, 1
      %p173 = por %p171, %p172
      %p174 = scmp.ne.s32.totalorder %s166, %s169
      %p175 = scmp.eq.s32.totalorder %s21, 0
      %p176 = por %p174, %p175
      %p177 = scmp.ne.s32.totalorder %s166, %s169
      %p178 = scmp.eq.s32.totalorder %s26, 1
      %p179 = por %p177, %p178
      %p180 = scmp.ne.s32.totalorder %s169, %s170
      %p181 = scmp.eq.s32.totalorder %s26, 0
      %p182 = por %p180, %p181
      %p183 = scmp.ne.s32.totalorder %s169, %s170
      %p184 = scmp.eq.s32.totalorder %s27, 1
      %p185 = por %p183, %p184
      %p187 = scmp.ne.s32.totalorder %s170, %s186
      %p188 = scmp.eq.s32.totalorder %s27, 0
      %p189 = por %p187, %p188
      %p190 = scmp.le.s32.totalorder 1, %s21
      %p191 = scmp.lt.s32.totalorder %s21, 3
      %p192 = pnand %p190, %p191
      %p193 = pneg %p192
      // Predicated region
      $region9: #{tpu_custom_call.1} parent=5 // pred_check
        _
      $region10: #{tpu_custom_call.1} parent=5 // pred_check_branch
        %195 = sbr.rel (%p192) target = $region12
      $region11: #{tpu_custom_call.1} parent=5 // pred_region
        %s196 = ssub.s32 %s21, 1
        // Predicated region
        $region13: #{tpu_custom_call.1} parent=11 // pred_check
          %p197 = pneg %p61
        $region14: #{tpu_custom_call.1} parent=11 // pred_check_branch
          %199 = sbr.rel (%p197) target = $region16
        $region15: #{tpu_custom_call.1} parent=11 // pred_region
          %s201 = ssub.s32 64, 64
          %202 = vsyncadd [#allocation6], %s201
          %205 = dma.hbm_to_smem %s0, 64, [#allocation3], [#allocation6]
        $region16: #{tpu_custom_call.1} parent=11 // pred_fallthru
          _
        // Predicated region
        $region17: #{tpu_custom_call.1} parent=11 // pred_check
          %p206 = pneg %p82
        $region18: #{tpu_custom_call.1} parent=11 // pred_check_branch
          %208 = sbr.rel (%p206) target = $region20
        $region19: #{tpu_custom_call.1} parent=11 // pred_region
          %s210 = ssub.s32 16, 16
          %211 = vsyncadd [#allocation7], %s210
          %s213 = sshll.u32 %s1, 4
          %s214 = int_to_ptr.vmem [resolvable:$true] %s213
          %216 = dma.vmem_to_smem %s214, 16, [#allocation8], [#allocation7]
        $region20: #{tpu_custom_call.1} parent=11 // pred_fallthru
          _
        // Predicated region
        $region21: #{tpu_custom_call.1} parent=11 // pred_check
          %p217 = pneg %p103
        $region22: #{tpu_custom_call.1} parent=11 // pred_check_branch
          %219 = sbr.rel (%p217) target = $region24
        $region23: #{tpu_custom_call.1} parent=11 // pred_region
          _
        $region24: #{tpu_custom_call.1} parent=11 // pred_fallthru
          _
        // Predicated region
        $region25: #{tpu_custom_call.1} parent=11 // pred_check
          %p220 = pneg %p124
        $region26: #{tpu_custom_call.1} parent=11 // pred_check_branch
          %222 = sbr.rel (%p220) target = $region28
        $region27: #{tpu_custom_call.1} parent=11 // pred_region
          %s224 = ssub.s32 1024, 1024
          %225 = vsyncadd [#allocation4], %s224
          %s226 = sshll.u32 [#allocation9], 4
          %s227 = int_to_ptr.vmem [resolvable:$true] %s226
          %232 = dma.hbm_to_vmem [thread:$0]  %s3, 1024, %s227, [#allocation4], 128, 128, 8
        $region28: #{tpu_custom_call.1} parent=11 // pred_fallthru
          _
      $region12: #{tpu_custom_call.1} parent=5 // pred_fallthru
        _
      %p233 = scmp.lt.s32.totalorder %s21, 2
      // Predicated region
      $region29: #{tpu_custom_call.1} parent=5 // pred_check
        %p234 = pneg %p233
      $region30: #{tpu_custom_call.1} parent=5 // pred_check_branch
        %236 = sbr.rel (%p234) target = $region32
      $region31: #{tpu_custom_call.1} parent=5 // pred_region
        // Predicated region
        $region33: #{tpu_custom_call.1} parent=31 // pred_check
          %p237 = pneg %p146
        $region34: #{tpu_custom_call.1} parent=31 // pred_check_branch
          %239 = sbr.rel (%p237) target = $region36
        $region35: #{tpu_custom_call.1} parent=31 // pred_region
          %s240 = sand.u32 %s136, 1
          %s241 = scalar_lea.sflag [#allocation11], %s240
          %s242 = sand.u32 %s136, 1
          %s243 = smul.addr %s242, 64
          %s244 = scalar_lea.vmem [#allocation10], %s243
          %s245 = smul.u32 2, %s29
          %s247 = ssub.s32 1024, 1024
          %248 = vsyncadd %s241, %s247
          %s249 = smul.addr %s28, 8
          %s250 = sadd.s32 %s245, %s249
          %s251 = smul.addr %s250, 128
          %s252 = scalar_lea.hbm %s4, %s251
          %s253 = sshll.u32 %s244, 4
          %s254 = int_to_ptr.vmem [resolvable:$true] %s253
          %259 = dma.hbm_to_vmem [thread:$0]  %s252, 1024, %s254, %s241, 128, 128, 8
        $region36: #{tpu_custom_call.1} parent=31 // pred_fallthru
          _
      $region32: #{tpu_custom_call.1} parent=5 // pred_fallthru
        _
      %p260 = scmp.le.s32.totalorder 1, %s21
      %p261 = scmp.lt.s32.totalorder %s21, 3
      %p262 = pnand %p260, %p261
      %p263 = pneg %p262
      // Predicated region
      $region37: #{tpu_custom_call.1} parent=5 // pred_check
        _
      $region38: #{tpu_custom_call.1} parent=5 // pred_check_branch
        %265 = sbr.rel (%p262) target = $region40
      $region39: #{tpu_custom_call.1} parent=5 // pred_region
        %s266 = ssub.s32 %s21, 1
        // Predicated region
        $region41: #{tpu_custom_call.1} parent=39 // pred_check
          %p267 = pneg %p61
        $region42: #{tpu_custom_call.1} parent=39 // pred_check_branch
          %269 = sbr.rel (%p267) target = $region44
        $region43: #{tpu_custom_call.1} parent=39 // pred_region
          %270 = dma.done [#allocation6], 64
        $region44: #{tpu_custom_call.1} parent=39 // pred_fallthru
          _
        // Predicated region
        $region45: #{tpu_custom_call.1} parent=39 // pred_check
          %p271 = pneg %p82
        $region46: #{tpu_custom_call.1} parent=39 // pred_check_branch
          %273 = sbr.rel (%p271) target = $region48
        $region47: #{tpu_custom_call.1} parent=39 // pred_region
          %274 = dma.done [#allocation7], 16
        $region48: #{tpu_custom_call.1} parent=39 // pred_fallthru
          _
        // Predicated region
        $region49: #{tpu_custom_call.1} parent=39 // pred_check
          %p275 = pneg %p124
        $region50: #{tpu_custom_call.1} parent=39 // pred_check_branch
          %277 = sbr.rel (%p275) target = $region52
        $region51: #{tpu_custom_call.1} parent=39 // pred_region
          %278 = dma.done [#allocation4], 1024
        $region52: #{tpu_custom_call.1} parent=39 // pred_fallthru
          _
        %s279 = sand.u32 %s139, 1
        %s280 = scalar_lea.sflag [#allocation11], %s279
        %s281 = sand.u32 %s139, 1
        %s282 = smul.addr %s281, 64
        %s283 = scalar_lea.vmem [#allocation10], %s282
        // Predicated region
        $region53: #{tpu_custom_call.1} parent=39 // pred_check
          %p284 = pneg %p152
        $region54: #{tpu_custom_call.1} parent=39 // pred_check_branch
          %286 = sbr.rel (%p284) target = $region56
        $region55: #{tpu_custom_call.1} parent=39 // pred_region
          %287 = dma.done %s280, 1024
        $region56: #{tpu_custom_call.1} parent=39 // pred_fallthru
          _
        %288 = sfence
        %p289 = pneg %p61
        %p290 = pneg %p58
        %p291 = pneg %p82
        %p292 = pneg %p79
        %p293 = pneg %p103
        %p294 = pneg %p100
        %p295 = pneg %p124
        %p296 = pneg %p121
        %s297 = sand.u32 %s139, 1
        %s298 = scalar_lea.sflag [#allocation11], %s297
        %s299 = sand.u32 %s139, 1
        %s300 = smul.addr %s299, 64
        %s301 = scalar_lea.vmem [#allocation10], %s300
        %p302 = pneg %p152
        %p303 = pneg %p149
        %p304 = pneg %p182
        %p305 = pneg %p179
        %s306 = sand.u32 %s169, 1
        %s307 = scalar_lea.sflag [#allocation5], %s306
        %s308 = sand.u32 %s169, 1
        %s309 = smul.addr %s308, 16
        %s310 = scalar_lea.vmem [#allocation12], %s309
        %s311 = smul.u32 2, %s32
        %s312 = smul.u32 2, %s32
        %s313 = sld [smem:[#allocation2]]
        %v314 = vld [vmem:[%s283] sm:$0xff]
        %v315 = vld [vmem:[%s283 + $0x8] sm:$0xff]
        %v316 = vld [vmem:[%s283 + $0x10] sm:$0xff]
        %v317 = vld [vmem:[%s283 + $0x18] sm:$0xff]
        %v318 = vld [vmem:[%s283 + $0x20] sm:$0xff]
        %v319 = vld [vmem:[%s283 + $0x28] sm:$0xff]
        %v320 = vld [vmem:[%s283 + $0x30] sm:$0xff]
        %v321 = vld [vmem:[%s283 + $0x38] sm:$0xff]
        %s322 = smul.u32 %s33, 4
        %s323 = smul.u32 %s322, 128
        %s324 = sld [smem:[#allocation3 + %s323]]
        %v325 = vstv %s324
        %v326 = vmul.f32 %v314, %v325
        %v327 = vmul.f32 %v315, %v325
        %s328 = sadd.s32 %s323, 1
        %s329 = sld [smem:[#allocation3 + %s328]]
        %v330 = vstv %s329
        %v331 = vmul.f32 %v316, %v330
        %v332 = vmul.f32 %v317, %v330
        %v333 = vadd.f32 %v326, %v331
        %v334 = vadd.f32 %v327, %v332
        %s335 = sadd.s32 %s323, 2
        %s336 = sld [smem:[#allocation3 + %s335]]
        %v337 = vstv %s336
        %v338 = vmul.f32 %v318, %v337
        %v339 = vmul.f32 %v319, %v337
        %v340 = vadd.f32 %v333, %v338
        %v341 = vadd.f32 %v334, %v339
        %s342 = sadd.s32 %s323, 3
        %s343 = sld [smem:[#allocation3 + %s342]]
        %v344 = vstv %s343
        %v345 = vmul.f32 %v320, %v344
        %v346 = vmul.f32 %v321, %v344
        %v347 = vadd.f32 %v340, %v345
        %v348 = vadd.f32 %v341, %v346
        %s349 = sld [smem:[#allocation8 + %s322]]
        %v350 = vstv %s349
        %v351 = vadd.f32 %v347, %v350
        %v352 = vadd.f32 %v348, %v350
        %vm353 = vcmp.gt.f32.partialorder %v351, 0.0
        %vm354 = vcmp.gt.f32.partialorder %v352, 0.0
        %v355 = vstv %s313
        %v356 = vmul.f32 %v355, %v351
        %v357 = vmul.f32 %v355, %v352
        %v358 = vsel %vm353, %v351, %v356
        %v359 = vsel %vm354, %v352, %v357
        %v360 = vld [vmem:[#allocation9] sm:$0xff]
        %v361 = vld [vmem:[#allocation9 + $0x8] sm:$0xff]
        %s362 = sadd.s32 %s322, 1
        %s363 = smul.u32 %s362, 128
        %s364 = sld [smem:[#allocation3 + %s363]]
        %v365 = vstv %s364
        %v366 = vmul.f32 %v314, %v365
        %v367 = vmul.f32 %v315, %v365
        %s368 = sadd.s32 %s363, 1
        %s369 = sld [smem:[#allocation3 + %s368]]
        %v370 = vstv %s369
        %v371 = vmul.f32 %v316, %v370
        %v372 = vmul.f32 %v317, %v370
        %v373 = vadd.f32 %v366, %v371
        %v374 = vadd.f32 %v367, %v372
        %s375 = sadd.s32 %s363, 2
        %s376 = sld [smem:[#allocation3 + %s375]]
        %v377 = vstv %s376
        %v378 = vmul.f32 %v318, %v377
        %v379 = vmul.f32 %v319, %v377
        %v380 = vadd.f32 %v373, %v378
        %v381 = vadd.f32 %v374, %v379
        %s382 = sadd.s32 %s363, 3
        %s383 = sld [smem:[#allocation3 + %s382]]
        %v384 = vstv %s383
        %v385 = vmul.f32 %v320, %v384
        %v386 = vmul.f32 %v321, %v384
        %v387 = vadd.f32 %v380, %v385
        %v388 = vadd.f32 %v381, %v386
        %s389 = sld [smem:[#allocation8 + %s362]]
        %v390 = vstv %s389
        %v391 = vadd.f32 %v387, %v390
        %v392 = vadd.f32 %v388, %v390
        %vm393 = vcmp.gt.f32.partialorder %v391, 0.0
        %vm394 = vcmp.gt.f32.partialorder %v392, 0.0
        %v395 = vmul.f32 %v355, %v391
        %v396 = vmul.f32 %v355, %v392
        %v397 = vsel %vm393, %v391, %v395
        %v398 = vsel %vm394, %v392, %v396
        %s399 = scalar_lea.vmem [#allocation9], 16
        %v400 = vld [vmem:[%s399] sm:$0xff]
        %v401 = vld [vmem:[%s399 + $0x8] sm:$0xff]
        %vm402 = vcmask 130048
        %v404 = vsel %vm402, %v397, 0
        %v407 = vsel %vm402, %v398, 0
        %409 = vmatprep.subr.mxu0 0.0
        %410 = vmatpush1.msra.mxu0 0.0
        %411 = vmatprep.subr.mxu0 0.0
        %412 = vmatpush1.msra.mxu0 0.0
        %413 = vmatprep.subr.mxu0 0.0
        %414 = vmatpush1.msra.mxu0 0.0
        %415 = vmatprep.subr.mxu0 0.0
        %416 = vmatpush1.msra.mxu0 0.0
        %417 = vmatprep.subr.mxu0 0.0
        %418 = vmatpush1.msra.mxu0 0.0
        %419 = vmatprep.subr.mxu0 0.0
        %420 = vmatpush1.msra.mxu0 0.0
        %421 = vmatprep.subr.mxu0 0.0
        %422 = vmatpush1.msra.mxu0 0.0
        %423 = vmatprep.subr.mxu0 0.0
        %424 = vmatpush1.msra.mxu0 0.0
        %425 = vmatprep.subr.mxu0 0.0
        %426 = vmatpush1.msra.mxu0 0.0
        %427 = vmatprep.subr.mxu0 0.0
        %428 = vmatpush1.msra.mxu0 0.0
        %429 = vmatprep.subr.mxu0 0.0
        %430 = vmatpush1.msra.mxu0 0.0
        %431 = vmatprep.subr.mxu0 0.0
        %432 = vmatpush1.msra.mxu0 0.0
        %433 = vmatprep.subr.mxu0 0.0
        %434 = vmatpush1.msra.mxu0 0.0
        %435 = vmatprep.subr.mxu0 0.0
        %436 = vmatpush1.msra.mxu0 0.0
        %437 = vmatprep.subr.mxu0 0.0
        %438 = vmatpush1.msra.mxu0 %v401
        %439 = vmatprep.subr.mxu0 0.0
        %440 = vmatpush1.msra.mxu0 %v400
        %441 = vmatprep.subr.mxu0 0.0
        %442 = vmatpush2.msra.mxu0 0.0
        %443 = vmatprep.subr.mxu0 0.0
        %444 = vmatpush2.msra.mxu0 0.0
        %445 = vmatprep.subr.mxu0 0.0
        %446 = vmatpush2.msra.mxu0 0.0
        %447 = vmatprep.subr.mxu0 0.0
        %448 = vmatpush2.msra.mxu0 0.0
        %449 = vmatprep.subr.mxu0 0.0
        %450 = vmatpush2.msra.mxu0 0.0
        %451 = vmatprep.subr.mxu0 0.0
        %452 = vmatpush2.msra.mxu0 0.0
        %453 = vmatprep.subr.mxu0 0.0
        %454 = vmatpush2.msra.mxu0 0.0
        %455 = vmatprep.subr.mxu0 0.0
        %456 = vmatpush2.msra.mxu0 0.0
        %457 = vmatprep.subr.mxu0 0.0
        %458 = vmatpush2.msra.mxu0 0.0
        %459 = vmatprep.subr.mxu0 0.0
        %460 = vmatpush2.msra.mxu0 0.0
        %461 = vmatprep.subr.mxu0 0.0
        %462 = vmatpush2.msra.mxu0 0.0
        %463 = vmatprep.subr.mxu0 0.0
        %464 = vmatpush2.msra.mxu0 0.0
        %465 = vmatprep.subr.mxu0 0.0
        %466 = vmatpush2.msra.mxu0 0.0
        %467 = vmatprep.subr.mxu0 0.0
        %468 = vmatpush2.msra.mxu0 0.0
        %469 = vmatprep.subr.mxu0 0.0
        %470 = vmatpush2.msra.mxu0 0.0
        %471 = vmatprep.subr.mxu0 0.0
        %472 = vmatpush2.msra.mxu0 0.0
        %473 = vmatprep.mubr.f32.mxu0 0.0
        %474 = vmatmul.mubr.f32.gmra.mxu0 %v404
        %v475 = vpop.f32.mrf.mxu0
        %v476 = vadd.f32 0.0, %v475
        %v477 = vpop.f32.mrf.mxu0
        %478 = vmatprep.mubr.f32.mxu0 0.0
        %479 = vmatmul.mubr.f32.gmra.mxu0 %v407
        %v480 = vpop.f32.mrf.mxu0
        %v481 = vadd.f32 0.0, %v480
        %v482 = vpop.f32.mrf.mxu0
        %483 = vdwg.mxu0
        %v485 = vsel %vm402, %v358, 0
        %v488 = vsel %vm402, %v359, 0
        %490 = vmatprep.subr.mxu0 0.0
        %491 = vmatpush1.msra.mxu0 0.0
        %492 = vmatprep.subr.mxu0 0.0
        %493 = vmatpush1.msra.mxu0 0.0
        %494 = vmatprep.subr.mxu0 0.0
        %495 = vmatpush1.msra.mxu0 0.0
        %496 = vmatprep.subr.mxu0 0.0
        %497 = vmatpush1.msra.mxu0 0.0
        %498 = vmatprep.subr.mxu0 0.0
        %499 = vmatpush1.msra.mxu0 0.0
        %500 = vmatprep.subr.mxu0 0.0
        %501 = vmatpush1.msra.mxu0 0.0
        %502 = vmatprep.subr.mxu0 0.0
        %503 = vmatpush1.msra.mxu0 0.0
        %504 = vmatprep.subr.mxu0 0.0
        %505 = vmatpush1.msra.mxu0 0.0
        %506 = vmatprep.subr.mxu0 0.0
        %507 = vmatpush1.msra.mxu0 0.0
        %508 = vmatprep.subr.mxu0 0.0
        %509 = vmatpush1.msra.mxu0 0.0
        %510 = vmatprep.subr.mxu0 0.0
        %511 = vmatpush1.msra.mxu0 0.0
        %512 = vmatprep.subr.mxu0 0.0
        %513 = vmatpush1.msra.mxu0 0.0
        %514 = vmatprep.subr.mxu0 0.0
        %515 = vmatpush1.msra.mxu0 0.0
        %516 = vmatprep.subr.mxu0 0.0
        %517 = vmatpush1.msra.mxu0 0.0
        %518 = vmatprep.subr.mxu0 0.0
        %519 = vmatpush1.msra.mxu0 %v361
        %520 = vmatprep.subr.mxu0 0.0
        %521 = vmatpush1.msra.mxu0 %v360
        %522 = vmatprep.subr.mxu0 0.0
        %523 = vmatpush2.msra.mxu0 0.0
        %524 = vmatprep.subr.mxu0 0.0
        %525 = vmatpush2.msra.mxu0 0.0
        %526 = vmatprep.subr.mxu0 0.0
        %527 = vmatpush2.msra.mxu0 0.0
        %528 = vmatprep.subr.mxu0 0.0
        %529 = vmatpush2.msra.mxu0 0.0
        %530 = vmatprep.subr.mxu0 0.0
        %531 = vmatpush2.msra.mxu0 0.0
        %532 = vmatprep.subr.mxu0 0.0
        %533 = vmatpush2.msra.mxu0 0.0
        %534 = vmatprep.subr.mxu0 0.0
        %535 = vmatpush2.msra.mxu0 0.0
        %536 = vmatprep.subr.mxu0 0.0
        %537 = vmatpush2.msra.mxu0 0.0
        %538 = vmatprep.subr.mxu0 0.0
        %539 = vmatpush2.msra.mxu0 0.0
        %540 = vmatprep.subr.mxu0 0.0
        %541 = vmatpush2.msra.mxu0 0.0
        %542 = vmatprep.subr.mxu0 0.0
        %543 = vmatpush2.msra.mxu0 0.0
        %544 = vmatprep.subr.mxu0 0.0
        %545 = vmatpush2.msra.mxu0 0.0
        %546 = vmatprep.subr.mxu0 0.0
        %547 = vmatpush2.msra.mxu0 0.0
        %548 = vmatprep.subr.mxu0 0.0
        %549 = vmatpush2.msra.mxu0 0.0
        %550 = vmatprep.subr.mxu0 0.0
        %551 = vmatpush2.msra.mxu0 0.0
        %552 = vmatprep.subr.mxu0 0.0
        %553 = vmatpush2.msra.mxu0 0.0
        %554 = vmatprep.mubr.f32.mxu0 0.0
        %555 = vmatmul.mubr.f32.gmra.mxu0 %v485
        %v556 = vpop.f32.mrf.mxu0
        %v557 = vadd.f32 %v476, %v556
        %v558 = vpop.f32.mrf.mxu0
        %559 = vmatprep.mubr.f32.mxu0 0.0
        %560 = vmatmul.mubr.f32.gmra.mxu0 %v488
        %v561 = vpop.f32.mrf.mxu0
        %v562 = vadd.f32 %v481, %v561
        %v563 = vpop.f32.mrf.mxu0
        %564 = vdwg.mxu0
        %s565 = sadd.s32 %s322, 2
        %s566 = smul.u32 %s565, 128
        %s567 = sld [smem:[#allocation3 + %s566]]
        %v568 = vstv %s567
        %v569 = vmul.f32 %v314, %v568
        %v570 = vmul.f32 %v315, %v568
        %s571 = sadd.s32 %s566, 1
        %s572 = sld [smem:[#allocation3 + %s571]]
        %v573 = vstv %s572
        %v574 = vmul.f32 %v316, %v573
        %v575 = vmul.f32 %v317, %v573
        %v576 = vadd.f32 %v569, %v574
        %v577 = vadd.f32 %v570, %v575
        %s578 = sadd.s32 %s566, 2
        %s579 = sld [smem:[#allocation3 + %s578]]
        %v580 = vstv %s579
        %v581 = vmul.f32 %v318, %v580
        %v582 = vmul.f32 %v319, %v580
        %v583 = vadd.f32 %v576, %v581
        %v584 = vadd.f32 %v577, %v582
        %s585 = sadd.s32 %s566, 3
        %s586 = sld [smem:[#allocation3 + %s585]]
        %v587 = vstv %s586
        %v588 = vmul.f32 %v320, %v587
        %v589 = vmul.f32 %v321, %v587
        %v590 = vadd.f32 %v583, %v588
        %v591 = vadd.f32 %v584, %v589
        %s592 = sld [smem:[#allocation8 + %s565]]
        %v593 = vstv %s592
        %v594 = vadd.f32 %v590, %v593
        %v595 = vadd.f32 %v591, %v593
        %vm596 = vcmp.gt.f32.partialorder %v594, 0.0
        %vm597 = vcmp.gt.f32.partialorder %v595, 0.0
        %v598 = vmul.f32 %v355, %v594
        %v599 = vmul.f32 %v355, %v595
        %v600 = vsel %vm596, %v594, %v598
        %v601 = vsel %vm597, %v595, %v599
        %s602 = scalar_lea.vmem [#allocation9], 32
        %v603 = vld [vmem:[%s602] sm:$0xff]
        %v604 = vld [vmem:[%s602 + $0x8] sm:$0xff]
        %v606 = vsel %vm402, %v600, 0
        %v609 = vsel %vm402, %v601, 0
        %611 = vmatprep.subr.mxu0 0.0
        %612 = vmatpush1.msra.mxu0 0.0
        %613 = vmatprep.subr.mxu0 0.0
        %614 = vmatpush1.msra.mxu0 0.0
        %615 = vmatprep.subr.mxu0 0.0
        %616 = vmatpush1.msra.mxu0 0.0
        %617 = vmatprep.subr.mxu0 0.0
        %618 = vmatpush1.msra.mxu0 0.0
        %619 = vmatprep.subr.mxu0 0.0
        %620 = vmatpush1.msra.mxu0 0.0
        %621 = vmatprep.subr.mxu0 0.0
        %622 = vmatpush1.msra.mxu0 0.0
        %623 = vmatprep.subr.mxu0 0.0
        %624 = vmatpush1.msra.mxu0 0.0
        %625 = vmatprep.subr.mxu0 0.0
        %626 = vmatpush1.msra.mxu0 0.0
        %627 = vmatprep.subr.mxu0 0.0
        %628 = vmatpush1.msra.mxu0 0.0
        %629 = vmatprep.subr.mxu0 0.0
        %630 = vmatpush1.msra.mxu0 0.0
        %631 = vmatprep.subr.mxu0 0.0
        %632 = vmatpush1.msra.mxu0 0.0
        %633 = vmatprep.subr.mxu0 0.0
        %634 = vmatpush1.msra.mxu0 0.0
        %635 = vmatprep.subr.mxu0 0.0
        %636 = vmatpush1.msra.mxu0 0.0
        %637 = vmatprep.subr.mxu0 0.0
        %638 = vmatpush1.msra.mxu0 0.0
        %639 = vmatprep.subr.mxu0 0.0
        %640 = vmatpush1.msra.mxu0 %v604
        %641 = vmatprep.subr.mxu0 0.0
        %642 = vmatpush1.msra.mxu0 %v603
        %643 = vmatprep.subr.mxu0 0.0
        %644 = vmatpush2.msra.mxu0 0.0
        %645 = vmatprep.subr.mxu0 0.0
        %646 = vmatpush2.msra.mxu0 0.0
        %647 = vmatprep.subr.mxu0 0.0
        %648 = vmatpush2.msra.mxu0 0.0
        %649 = vmatprep.subr.mxu0 0.0
        %650 = vmatpush2.msra.mxu0 0.0
        %651 = vmatprep.subr.mxu0 0.0
        %652 = vmatpush2.msra.mxu0 0.0
        %653 = vmatprep.subr.mxu0 0.0
        %654 = vmatpush2.msra.mxu0 0.0
        %655 = vmatprep.subr.mxu0 0.0
        %656 = vmatpush2.msra.mxu0 0.0
        %657 = vmatprep.subr.mxu0 0.0
        %658 = vmatpush2.msra.mxu0 0.0
        %659 = vmatprep.subr.mxu0 0.0
        %660 = vmatpush2.msra.mxu0 0.0
        %661 = vmatprep.subr.mxu0 0.0
        %662 = vmatpush2.msra.mxu0 0.0
        %663 = vmatprep.subr.mxu0 0.0
        %664 = vmatpush2.msra.mxu0 0.0
        %665 = vmatprep.subr.mxu0 0.0
        %666 = vmatpush2.msra.mxu0 0.0
        %667 = vmatprep.subr.mxu0 0.0
        %668 = vmatpush2.msra.mxu0 0.0
        %669 = vmatprep.subr.mxu0 0.0
        %670 = vmatpush2.msra.mxu0 0.0
        %671 = vmatprep.subr.mxu0 0.0
        %672 = vmatpush2.msra.mxu0 0.0
        %673 = vmatprep.subr.mxu0 0.0
        %674 = vmatpush2.msra.mxu0 0.0
        %675 = vmatprep.mubr.f32.mxu0 0.0
        %676 = vmatmul.mubr.f32.gmra.mxu0 %v606
        %v677 = vpop.f32.mrf.mxu0
        %v678 = vadd.f32 0.0, %v677
        %v679 = vpop.f32.mrf.mxu0
        %680 = vmatprep.mubr.f32.mxu0 0.0
        %681 = vmatmul.mubr.f32.gmra.mxu0 %v609
        %v682 = vpop.f32.mrf.mxu0
        %v683 = vadd.f32 0.0, %v682
        %v684 = vpop.f32.mrf.mxu0
        %685 = vdwg.mxu0
        %v686 = vadd.f32 %v557, %v678
        %v687 = vadd.f32 %v562, %v683
        %s688 = sadd.s32 %s322, 3
        %s689 = smul.u32 %s688, 128
        %s690 = sld [smem:[#allocation3 + %s689]]
        %v691 = vstv %s690
        %v692 = vmul.f32 %v314, %v691
        %v693 = vmul.f32 %v315, %v691
        %s694 = sadd.s32 %s689, 1
        %s695 = sld [smem:[#allocation3 + %s694]]
        %v696 = vstv %s695
        %v697 = vmul.f32 %v316, %v696
        %v698 = vmul.f32 %v317, %v696
        %v699 = vadd.f32 %v692, %v697
        %v700 = vadd.f32 %v693, %v698
        %s701 = sadd.s32 %s689, 2
        %s702 = sld [smem:[#allocation3 + %s701]]
        %v703 = vstv %s702
        %v704 = vmul.f32 %v318, %v703
        %v705 = vmul.f32 %v319, %v703
        %v706 = vadd.f32 %v699, %v704
        %v707 = vadd.f32 %v700, %v705
        %s708 = sadd.s32 %s689, 3
        %s709 = sld [smem:[#allocation3 + %s708]]
        %v710 = vstv %s709
        %v711 = vmul.f32 %v320, %v710
        %v712 = vmul.f32 %v321, %v710
        %v713 = vadd.f32 %v706, %v711
        %v714 = vadd.f32 %v707, %v712
        %s715 = sld [smem:[#allocation8 + %s688]]
        %v716 = vstv %s715
        %v717 = vadd.f32 %v713, %v716
        %v718 = vadd.f32 %v714, %v716
        %vm719 = vcmp.gt.f32.partialorder %v717, 0.0
        %vm720 = vcmp.gt.f32.partialorder %v718, 0.0
        %v721 = vmul.f32 %v355, %v717
        %v722 = vmul.f32 %v355, %v718
        %v723 = vsel %vm719, %v717, %v721
        %v724 = vsel %vm720, %v718, %v722
        %s725 = scalar_lea.vmem [#allocation9], 48
        %v726 = vld [vmem:[%s725] sm:$0xff]
        %v727 = vld [vmem:[%s725 + $0x8] sm:$0xff]
        %v729 = vsel %vm402, %v723, 0
        %v732 = vsel %vm402, %v724, 0
        %734 = vmatprep.subr.mxu0 0.0
        %735 = vmatpush1.msra.mxu0 0.0
        %736 = vmatprep.subr.mxu0 0.0
        %737 = vmatpush1.msra.mxu0 0.0
        %738 = vmatprep.subr.mxu0 0.0
        %739 = vmatpush1.msra.mxu0 0.0
        %740 = vmatprep.subr.mxu0 0.0
        %741 = vmatpush1.msra.mxu0 0.0
        %742 = vmatprep.subr.mxu0 0.0
        %743 = vmatpush1.msra.mxu0 0.0
        %744 = vmatprep.subr.mxu0 0.0
        %745 = vmatpush1.msra.mxu0 0.0
        %746 = vmatprep.subr.mxu0 0.0
        %747 = vmatpush1.msra.mxu0 0.0
        %748 = vmatprep.subr.mxu0 0.0
        %749 = vmatpush1.msra.mxu0 0.0
        %750 = vmatprep.subr.mxu0 0.0
        %751 = vmatpush1.msra.mxu0 0.0
        %752 = vmatprep.subr.mxu0 0.0
        %753 = vmatpush1.msra.mxu0 0.0
        %754 = vmatprep.subr.mxu0 0.0
        %755 = vmatpush1.msra.mxu0 0.0
        %756 = vmatprep.subr.mxu0 0.0
        %757 = vmatpush1.msra.mxu0 0.0
        %758 = vmatprep.subr.mxu0 0.0
        %759 = vmatpush1.msra.mxu0 0.0
        %760 = vmatprep.subr.mxu0 0.0
        %761 = vmatpush1.msra.mxu0 0.0
        %762 = vmatprep.subr.mxu0 0.0
        %763 = vmatpush1.msra.mxu0 %v727
        %764 = vmatprep.subr.mxu0 0.0
        %765 = vmatpush1.msra.mxu0 %v726
        %766 = vmatprep.subr.mxu0 0.0
        %767 = vmatpush2.msra.mxu0 0.0
        %768 = vmatprep.subr.mxu0 0.0
        %769 = vmatpush2.msra.mxu0 0.0
        %770 = vmatprep.subr.mxu0 0.0
        %771 = vmatpush2.msra.mxu0 0.0
        %772 = vmatprep.subr.mxu0 0.0
        %773 = vmatpush2.msra.mxu0 0.0
        %774 = vmatprep.subr.mxu0 0.0
        %775 = vmatpush2.msra.mxu0 0.0
        %776 = vmatprep.subr.mxu0 0.0
        %777 = vmatpush2.msra.mxu0 0.0
        %778 = vmatprep.subr.mxu0 0.0
        %779 = vmatpush2.msra.mxu0 0.0
        %780 = vmatprep.subr.mxu0 0.0
        %781 = vmatpush2.msra.mxu0 0.0
        %782 = vmatprep.subr.mxu0 0.0
        %783 = vmatpush2.msra.mxu0 0.0
        %784 = vmatprep.subr.mxu0 0.0
        %785 = vmatpush2.msra.mxu0 0.0
        %786 = vmatprep.subr.mxu0 0.0
        %787 = vmatpush2.msra.mxu0 0.0
        %788 = vmatprep.subr.mxu0 0.0
        %789 = vmatpush2.msra.mxu0 0.0
        %790 = vmatprep.subr.mxu0 0.0
        %791 = vmatpush2.msra.mxu0 0.0
        %792 = vmatprep.subr.mxu0 0.0
        %793 = vmatpush2.msra.mxu0 0.0
        %794 = vmatprep.subr.mxu0 0.0
        %795 = vmatpush2.msra.mxu0 0.0
        %796 = vmatprep.subr.mxu0 0.0
        %797 = vmatpush2.msra.mxu0 0.0
        %798 = vmatprep.mubr.f32.mxu0 0.0
        %799 = vmatmul.mubr.f32.gmra.mxu0 %v729
        %v800 = vpop.f32.mrf.mxu0
        %v801 = vadd.f32 0.0, %v800
        %v802 = vpop.f32.mrf.mxu0
        %803 = vmatprep.mubr.f32.mxu0 0.0
        %804 = vmatmul.mubr.f32.gmra.mxu0 %v732
        %v805 = vpop.f32.mrf.mxu0
        %v806 = vadd.f32 0.0, %v805
        %v807 = vpop.f32.mrf.mxu0
        %808 = vdwg.mxu0
        %v809 = vadd.f32 %v686, %v801
        %v810 = vadd.f32 %v687, %v806
        %vm811 = vcmask 523264
        %812 = vst.msk [vmem:[%s310] sm:$0xff] %vm811, %v809
        %813 = vst.msk [vmem:[%s310 + $0x8] sm:$0xff] %vm811, %v810
        %s814 = sand.u32 %s169, 1
        %s815 = scalar_lea.sflag [#allocation5], %s814
        %s816 = sand.u32 %s169, 1
        %s817 = smul.addr %s816, 16
        %s818 = scalar_lea.vmem [#allocation12], %s817
        // Predicated region
        $region57: #{tpu_custom_call.1} parent=39 // pred_check
          %p819 = pneg %p179
        $region58: #{tpu_custom_call.1} parent=39 // pred_check_branch
          %821 = sbr.rel (%p819) target = $region60
        $region59: #{tpu_custom_call.1} parent=39 // pred_region
          %s822 = smul.u32 2, %s32
          %s824 = ssub.s32 256, 256
          %825 = vsyncadd %s815, %s824
          %s826 = smul.addr %s33, 2
          %s827 = sadd.s32 %s822, %s826
          %s828 = smul.addr %s31, 2
          %s829 = sadd.s32 %s827, %s828
          %s830 = smul.addr %s829, 128
          %s831 = scalar_lea.hbm %s5, %s830
          %s832 = sshll.u32 %s818, 4
          %s833 = int_to_ptr.vmem [resolvable:$true] %s832
          %838 = dma.vmem_to_hbm [thread:$0]  %s833, 256, %s831, %s815, 128, 128, 8
        $region60: #{tpu_custom_call.1} parent=39 // pred_fallthru
          _
      $region40: #{tpu_custom_call.1} parent=5 // pred_fallthru
        _
      %p839 = scmp.le.s32.totalorder 2, %s21
      // Predicated region
      $region61: #{tpu_custom_call.1} parent=5 // pred_check
        %p840 = pneg %p839
      $region62: #{tpu_custom_call.1} parent=5 // pred_check_branch
        %842 = sbr.rel (%p840) target = $region64
      $region63: #{tpu_custom_call.1} parent=5 // pred_region
        %s843 = ssub.s32 %s21, 2
        // Predicated region
        $region65: #{tpu_custom_call.1} parent=63 // pred_check
          %p844 = pneg %p185
        $region66: #{tpu_custom_call.1} parent=63 // pred_check_branch
          %846 = sbr.rel (%p844) target = $region68
        $region67: #{tpu_custom_call.1} parent=63 // pred_region
          %s847 = sand.u32 %s170, 1
          %s848 = scalar_lea.sflag [#allocation5], %s847
          %s849 = sand.u32 %s170, 1
          %s850 = smul.addr %s849, 16
          %s851 = scalar_lea.vmem [#allocation12], %s850
          %852 = dma.done %s848, 256
        $region68: #{tpu_custom_call.1} parent=63 // pred_fallthru
          _
      $region64: #{tpu_custom_call.1} parent=5 // pred_fallthru
        _
    $region6: #{tpu_custom_call.1} parent=1 // loop_footer
      %s25 = sadd.s32 1, %s21
    $region7: #{tpu_custom_call.1} parent=1 // loop_footer_branch
      %20 = sbr.rel target = $region3
    $region8: #{tpu_custom_call.1} parent=1 // loop_exit
      _
    %853 = vsyncpa [#allocation4], 1
    %s854 = scalar_lea.sflag [#allocation4], 1
    %855 = vsyncpa %s854, 1
    %856 = vsyncpa [#allocation11], 1
    %s857 = scalar_lea.sflag [#allocation11], 1
    %858 = vsyncpa %s857, 1
    %859 = vsyncpa [#allocation5], 1
    %s860 = scalar_lea.sflag [#allocation5], 1
    %861 = vsyncpa %s860, 1
    %862 = vsyncpa [#allocation6], 1
    %s863 = scalar_lea.sflag [#allocation6], 1
    %864 = vsyncpa %s863, 1
    %865 = vsyncpa [#allocation7], 1
    %s866 = scalar_lea.sflag [#allocation7], 1
    %867 = vsyncpa %s866, 1

</llo_original>
